<compile_context>
chip_gen: v5e
topology: v5e:2x2
jax: 0.10.0
libtpu: 0.0.40
codegen_flags: <defaults>
</compile_context>

<pallas_src>
import numpy as np

import jax
import jax.numpy as jnp
from jax.experimental import pallas as pl
from jax.experimental.pallas import tpu as pltpu


# ----------------------------------------------------------------------------
# Pallas kernel: hoisted op/left matmul + serial gated-merge loop (GateNN,
# one_layer=True), all steps of one decoder token in a single pallas_call.
# ----------------------------------------------------------------------------
def _tree_merge_kernel(sizes_ref, opleft_ref, right_init_ref, w_ol_ref, w_r_ref,
                       b_ref, out_ref, pre_scratch):
    MAX_B, Hp = out_ref.shape          # padded batch rows, padded hidden (lane-dense)
    S = sizes_ref.shape[0]             # number of serial merge steps (static)

    # ---- hoisted, fully parallel part: op/left contributions + bias ----
    # (S*MAX_B, 2Hp) @ (2Hp, 2Hp): one big MXU matmul, f32 accumulate.
    pre_scratch[...] = (
        jnp.dot(opleft_ref[...], w_ol_ref[...], preferred_element_type=jnp.float32)
        + b_ref[...])

    # ---- serial part: only the right-operand matmul is on the chain ----
    def body(s, right):
        start = pl.multiple_of(s * MAX_B, MAX_B)
        pre = pre_scratch[pl.ds(start, MAX_B), :] + jnp.dot(
            right, w_r_ref[...], preferred_element_type=jnp.float32)
        merged = jnp.tanh(pre[:, :Hp]) * jax.nn.sigmoid(pre[:, Hp:])
        # Rows >= this step's batch size keep their previous (final) value.
        row = jax.lax.broadcasted_iota(jnp.int32, merged.shape, 0)
        return jnp.where(row < sizes_ref[s], merged, right)

    out_ref[...] = jax.lax.fori_loop(0, S, body, right_init_ref[...], unroll=True)


@jax.jit
def _tree_merge_call(step_sizes, opleft_2d, right_init, w_ol, w_r, b):
    """step_sizes: (S,) i32; opleft_2d: (S*MAX_B, 2Hp) f32;
    right_init: (MAX_B, Hp) f32; w_ol: (2Hp, 2Hp); w_r: (Hp, 2Hp); b: (1, 2Hp)."""
    S = step_sizes.shape[0]
    SB, twoHp = opleft_2d.shape
    MAX_B, Hp = right_init.shape
    return pl.pallas_call(
        _tree_merge_kernel,
        out_shape=jax.ShapeDtypeStruct((MAX_B, Hp), jnp.float32),
        grid_spec=pltpu.PrefetchScalarGridSpec(
            num_scalar_prefetch=1,
            grid=(1,),
            in_specs=[
                pl.BlockSpec((SB, twoHp), lambda i, sz: (0, 0)),      # op|left slab
                pl.BlockSpec((MAX_B, Hp), lambda i, sz: (0, 0)),      # right init
                pl.BlockSpec((twoHp, twoHp), lambda i, sz: (0, 0)),   # W (op|left rows)
                pl.BlockSpec((Hp, twoHp), lambda i, sz: (0, 0)),      # W (right rows)
                pl.BlockSpec((1, twoHp), lambda i, sz: (0, 0)),       # fused bias
            ],
            out_specs=pl.BlockSpec((MAX_B, Hp), lambda i, sz: (0, 0)),
            scratch_shapes=[pltpu.VMEM((SB, twoHp), jnp.float32)],    # hoisted pre_ol
        ),
        compiler_params=pltpu.CompilerParams(dimension_semantics=("arbitrary",)),
    )(step_sizes, opleft_2d, right_init, w_ol, w_r, b)


# ----------------------------------------------------------------------------
# Helpers
# ----------------------------------------------------------------------------
def _round_up(n, m):
    return ((n + m - 1) // m) * m


def _ref_merge(op, left, right, w, b):
    """Pure-JAX f32 reference for one merge step (unpadded fused layout)."""
    x = jnp.concatenate([jnp.asarray(op), jnp.asarray(left), jnp.asarray(right)],
                        axis=-1).astype(jnp.float32)
    pre = jnp.dot(x, w, preferred_element_type=jnp.float32) + b
    h_dim = w.shape[1] // 2
    return jnp.tanh(pre[:, :h_dim]) * jax.nn.sigmoid(pre[:, h_dim:])


# ----------------------------------------------------------------------------
# Host-side tree machinery (mirrors the PyTorch reference)
# ----------------------------------------------------------------------------
class TreeEmbeddingNode:
    def __init__(self, embedding, terminal):
        self.embedding = embedding
        self.terminal = terminal


class TreeEmbeddingModel:
    """JAX/Pallas port of the PyTorch TreeEmbeddingModel (eval mode)."""

    def __init__(self, hidden_dim, op_set, key):
        self.hidden_dim = hidden_dim
        self.op_set = set(op_set)
        H = hidden_dim
        Hp = max(128, _round_up(H, 128))   # lane-dense padded hidden dim
        self.Hp = Hp

        in_dim = 3 * H  # input1_dim (2H) + hidden_dim (H)
        lim = 1.0 / float(in_dim) ** 0.5
        k1, k2, k3, k4 = jax.random.split(key, 4)
        wh = jax.random.uniform(k1, (in_dim, H), minval=-lim, maxval=lim,
                                dtype=jnp.float32)
        bh = jax.random.uniform(k2, (1, H), minval=-lim, maxval=lim,
                                dtype=jnp.float32)
        wg = jax.random.uniform(k3, (in_dim, H), minval=-lim, maxval=lim,
                                dtype=jnp.float32)
        bg = jax.random.uniform(k4, (1, H), minval=-lim, maxval=lim,
                                dtype=jnp.float32)
        # TODO(synk): when porting real PyTorch GateNN weights, verify the
        # [op | left | right] row order against hidden_l1/gate_l1.weight.T.

        # Unpadded fused params (reference path): W_ref (3H, 2H), b_ref (1, 2H).
        self.W_ref = jnp.concatenate([wh, wg], axis=1)
        self.b_ref = jnp.concatenate([bh, bg], axis=1)

        # Padded, split kernel params (f32, lane-dense).  Zero padding keeps
        # padded lanes exactly 0 through tanh(0)*sigmoid(0).
        wh_np, wg_np = np.asarray(wh), np.asarray(wg)
        bh_np, bg_np = np.asarray(bh), np.asarray(bg)
        w_ol = np.zeros((2 * Hp, 2 * Hp), np.float32)
        w_ol[0:H, 0:H] = wh_np[0:H]                 # op rows -> tanh cols
        w_ol[0:H, Hp:Hp + H] = wg_np[0:H]           # op rows -> gate cols
        w_ol[Hp:Hp + H, 0:H] = wh_np[H:2 * H]       # left rows
        w_ol[Hp:Hp + H, Hp:Hp + H] = wg_np[H:2 * H]
        w_r = np.zeros((Hp, 2 * Hp), np.float32)
        w_r[0:H, 0:H] = wh_np[2 * H:3 * H]          # right rows
        w_r[0:H, Hp:Hp + H] = wg_np[2 * H:3 * H]
        b_pad = np.zeros((1, 2 * Hp), np.float32)
        b_pad[0, 0:H] = bh_np[0]
        b_pad[0, Hp:Hp + H] = bg_np[0]
        self.W_ol = jnp.asarray(w_ol)
        self.W_r = jnp.asarray(w_r)
        self.b = jnp.asarray(b_pad)
        # TODO(synk): nn.Dropout(p=0.4) layers are eval-mode identity here.

    def _run_steps(self, step_sizes, opleft_2d, right_init):
        return _tree_merge_call(step_sizes, opleft_2d, right_init,
                                self.W_ol, self.W_r, self.b)

    # ---- GateNN.forward(hidden=op, input1=cat(left, right)), via Pallas ----
    def merge(self, op_embedding, left_embedding, right_embedding):
        H, Hp = self.hidden_dim, self.Hp
        op = np.asarray(op_embedding, dtype=np.float32)
        left = np.asarray(left_embedding, dtype=np.float32)
        right = np.asarray(right_embedding, dtype=np.float32)
        B = op.shape[0]
        max_b = max(8, _round_up(B, 8))
        opleft = np.zeros((max_b, 2 * Hp), np.float32)
        opleft[:B, :H] = op
        opleft[:B, Hp:Hp + H] = left
        right_init = np.zeros((max_b, Hp), np.float32)
        right_init[:B, :H] = right
        sizes = np.array([B], dtype=np.int32)
        out = self._run_steps(sizes, opleft, right_init)
        return out[:B, :H]

    def get_merge_embeddings(self, tree_stack):
        left_embeddings = []
        op_embeddings = []
        while (len(tree_stack) >= 2 and tree_stack[-1].terminal
               and (not tree_stack[-2].terminal)):
            left_embeddings.append(tree_stack.pop().embedding)
            op_embeddings.append(tree_stack.pop().embedding)
        return left_embeddings, op_embeddings

    def forward(self, class_embedding, tree_stacks, embed_node_index):
        H, Hp = self.hidden_dim, self.Hp
        batch_arange = jnp.arange(embed_node_index.shape[0])
        labels_embedding = class_embedding[batch_arange, embed_node_index]

        # TODO(synk): this single host round-trip is inherent to the
        # data-dependent tree bookkeeping; in a real decoder the labels come
        # from the host-side sampled token stream, avoiding it.
        node_labels = [int(v) for v in jax.device_get(embed_node_index)]
        labels_np = np.asarray(jax.device_get(labels_embedding), dtype=np.float32)

        merge_batch = []
        right_rows = []
        all_left = []
        all_op = []
        batch_step_size = []

        for b_idx, (node_label, tree_stack) in enumerate(zip(node_labels, tree_stacks)):
            label_embedding = labels_np[b_idx]
            if node_label in self.op_set:
                tree_stack.append(TreeEmbeddingNode(label_embedding, terminal=False))
            else:
                left_embs, op_embs = self.get_merge_embeddings(tree_stack)
                n_steps = len(left_embs)
                if n_steps > 0:
                    merge_batch.append(b_idx)
                    right_rows.append(label_embedding)
                    all_left.append(left_embs)
                    all_op.append(op_embs)
                    batch_step_size.append(n_steps)
                else:
                    tree_stack.append(TreeEmbeddingNode(label_embedding, terminal=True))

        if merge_batch:
            # Sort rows by merge-step count, descending (prefix property: at
            # step s, exactly the first step_sizes[s] rows participate).
            order = sorted(range(len(batch_step_size)),
                           key=lambda i: batch_step_size[i], reverse=True)
            merge_batch = [merge_batch[i] for i in order]
            right_rows = [right_rows[i] for i in order]
            all_left = [all_left[i] for i in order]
            all_op = [all_op[i] for i in order]
            batch_step_size = [batch_step_size[i] for i in order]

            n_merge = len(merge_batch)
            max_b = max(8, _round_up(n_merge, 8))
            S = batch_step_size[0]

            # Host-side numpy slab assembly: one transfer per operand.
            opleft = np.zeros((S, max_b, 2 * Hp), np.float32)
            for row, (lefts, ops) in enumerate(zip(all_left, all_op)):
                for s in range(len(lefts)):
                    opleft[s, row, :H] = np.asarray(ops[s], dtype=np.float32)
                    opleft[s, row, Hp:Hp + H] = np.asarray(lefts[s], dtype=np.float32)
            sizes = np.array([sum(1 for n in batch_step_size if n > s)
                              for s in range(S)], dtype=np.int32)
            right_init = np.zeros((max_b, Hp), np.float32)
            right_init[:n_merge, :H] = np.stack(
                [np.asarray(r, dtype=np.float32) for r in right_rows], axis=0)

            # One kernel launch for ALL merge steps of this token.
            final_right = self._run_steps(
                sizes, opleft.reshape(S * max_b, 2 * Hp), right_init)
            # Row e stops updating after batch_step_size[e] masked steps, so its
            # final value equals the reference's incrementally-popped result.
            final_np = np.asarray(jax.device_get(final_right))[:n_merge, :H]

            for e in range(n_merge):
                tree_stacks[merge_batch[e]].append(
                    TreeEmbeddingNode(final_np[e], terminal=True))

        return labels_embedding


# ----------------------------------------------------------------------------
# Main
# ----------------------------------------------------------------------------
if __name__ == "__main__":
    HIDDEN = 32
    BATCH = 3
    NUM_CLASSES = 6
    OP_SET = {0, 1}  # class indices 0 and 1 are operators, the rest terminals

    key = jax.random.PRNGKey(0)
    k_model, k_embed = jax.random.split(key)

    model = TreeEmbeddingModel(HIDDEN, OP_SET, k_model)

    # class_embedding: (batch, num_classes, hidden)
    class_embedding = jax.random.normal(
        k_embed, (BATCH, NUM_CLASSES, HIDDEN), dtype=jnp.float32)
    ce = class_embedding
    ce_np = np.asarray(jax.device_get(class_embedding))

    # --- sanity check of the fused Pallas merge kernel against pure JAX -----
    op_t = ce[0, 0:2]      # (2, H)
    left_t = ce[1, 2:4]    # (2, H)
    right_t = ce[2, 3:5]   # (2, H)
    got = model.merge(op_t, left_t, right_t)
    got = jax.block_until_ready(got)
    ref = _ref_merge(op_t, left_t, right_t, model.W_ref, model.b_ref)
    assert got.shape == (2, HIDDEN)
    assert jnp.allclose(got, ref, atol=1e-3, rtol=1e-3), "merge kernel mismatch"

    # --- build tree stacks exercising 1-step and 2-step merges --------------
    tree_stacks = [
        # batch 0: [op, terminal]  -> new terminal triggers 1 merge
        [TreeEmbeddingNode(ce_np[0, 0], terminal=False),
         TreeEmbeddingNode(ce_np[0, 2], terminal=True)],
        # batch 1: [op, terminal, op, terminal] -> new terminal triggers 2 merges
        [TreeEmbeddingNode(ce_np[1, 0], terminal=False),
         TreeEmbeddingNode(ce_np[1, 2], terminal=True),
         TreeEmbeddingNode(ce_np[1, 1], terminal=False),
         TreeEmbeddingNode(ce_np[1, 3], terminal=True)],
        # batch 2: empty stack, new label is an operator -> just push
        [],
    ]
    # labels: batch 0 -> class 3 (terminal), batch 1 -> class 4 (terminal),
    #         batch 2 -> class 0 (operator)
    embed_node_index = jnp.array([3, 4, 0], dtype=jnp.int32)

    labels_embedding = model.forward(class_embedding, tree_stacks, embed_node_index)
    labels_embedding = jax.block_until_ready(labels_embedding)

    assert labels_embedding.shape == (BATCH, HIDDEN)
    assert all(len(st) == 1 for st in tree_stacks)

    # --- check the fused multi-step kernel against a serial pure-JAX walk ---
    b0_ref = _ref_merge(ce[0, 0:1], ce[0, 2:3], labels_embedding[0:1],
                        model.W_ref, model.b_ref)
    r1 = _ref_merge(ce[1, 1:2], ce[1, 3:4], labels_embedding[1:2],
                    model.W_ref, model.b_ref)
    b1_ref = _ref_merge(ce[1, 0:1], ce[1, 2:3], r1, model.W_ref, model.b_ref)
    assert jnp.allclose(jnp.asarray(tree_stacks[0][-1].embedding), b0_ref[0],
                        atol=1e-2, rtol=1e-2), "1-step tree merge mismatch"
    assert jnp.allclose(jnp.asarray(tree_stacks[1][-1].embedding), b1_ref[0],
                        atol=1e-2, rtol=1e-2), "2-step tree merge mismatch"
    assert jnp.allclose(jnp.asarray(tree_stacks[2][-1].embedding),
                        labels_embedding[2])

    print("KERNEL_OK")
</pallas_src>

<mosaic_0001>
module attributes {stable_mosaic.version = 11 : i64} {
  func.func @_tree_merge_kernel(%arg0: i32, %arg1: memref<1xi32, #tpu.memory_space<smem>>, %arg2: memref<8x256xf32, #tpu.memory_space<vmem>>, %arg3: memref<8x128xf32, #tpu.memory_space<vmem>>, %arg4: memref<256x256xf32, #tpu.memory_space<vmem>>, %arg5: memref<128x256xf32, #tpu.memory_space<vmem>>, %arg6: memref<1x256xf32, #tpu.memory_space<vmem>>, %arg7: memref<8x128xf32, #tpu.memory_space<vmem>>, %arg8: memref<8x256xf32, #tpu.memory_space<vmem>>) attributes {dimension_semantics = [#tpu.dimension_semantics<arbitrary>], iteration_bounds = array<i64: 1>, scalar_prefetch = 1 : i64, scratch_operands = 1 : i64, tpu.core_type = #tpu.core_type<tc>, window_params = [{pipeline_mode = #tpu.pipeline_mode<synchronous>, transform_indices = @transform_0, window_bounds = array<i64: 8, 256>}, {pipeline_mode = #tpu.pipeline_mode<synchronous>, transform_indices = @transform_1, window_bounds = array<i64: 8, 128>}, {pipeline_mode = #tpu.pipeline_mode<synchronous>, transform_indices = @transform_2, window_bounds = array<i64: 256, 256>}, {pipeline_mode = #tpu.pipeline_mode<synchronous>, transform_indices = @transform_3, window_bounds = array<i64: 128, 256>}, {pipeline_mode = #tpu.pipeline_mode<synchronous>, transform_indices = @transform_4, window_bounds = array<i64: 1, 256>}, {pipeline_mode = #tpu.pipeline_mode<synchronous>, transform_indices = @transform_5, window_bounds = array<i64: 8, 128>}]} {
    %c0 = arith.constant 0 : index
    %c0_0 = arith.constant 0 : index
    %0 = vector.load %arg2[%c0, %c0_0] : memref<8x256xf32, #tpu.memory_space<vmem>>, vector<8x256xf32>
    %c0_1 = arith.constant 0 : index
    %c0_2 = arith.constant 0 : index
    %1 = vector.load %arg4[%c0_1, %c0_2] : memref<256x256xf32, #tpu.memory_space<vmem>>, vector<256x256xf32>
    %cst = arith.constant dense<0.000000e+00> : vector<8x256xf32>
    %2 = tpu.matmul %0, %1, %cst {dimension_numbers = #tpu.dot_dimension_numbers<[1], [0], [0], [1], [0, 0, 1, 1], [], []>} : vector<8x256xf32>, vector<256x256xf32>, vector<8x256xf32> -> vector<8x256xf32>
    %c0_3 = arith.constant 0 : index
    %c0_4 = arith.constant 0 : index
    %3 = vector.load %arg6[%c0_3, %c0_4] : memref<1x256xf32, #tpu.memory_space<vmem>>, vector<1x256xf32>
    %4 = vector.broadcast %3 : vector<1x256xf32> to vector<8x256xf32>
    %5 = arith.addf %2, %4 : vector<8x256xf32>
    %c0_5 = arith.constant 0 : index
    %c0_6 = arith.constant 0 : index
    %6 = vector.load %arg8[%c0_5, %c0_6] : memref<8x256xf32, #tpu.memory_space<vmem>>, vector<8x256xf32>
    tpu.vector_store %arg8[%c0_5, %c0_6], %5 {strides = array<i32>} : memref<8x256xf32, #tpu.memory_space<vmem>>, vector<8x256xf32>,
    %c0_7 = arith.constant 0 : index
    %c0_8 = arith.constant 0 : index
    %7 = vector.load %arg3[%c0_7, %c0_8] : memref<8x128xf32, #tpu.memory_space<vmem>>, vector<8x128xf32>
    %c0_i32 = arith.constant 0 : i32
    %c8_i32 = arith.constant 8 : i32
    %8 = arith.muli %c0_i32, %c8_i32 : i32
    %9 = tpu.assume_multiple %8, 8 : i32
    %10 = arith.index_cast %9 : i32 to index
    %c0_9 = arith.constant 0 : index
    %11 = vector.load %arg8[%10, %c0_9] : memref<8x256xf32, #tpu.memory_space<vmem>>, vector<8x256xf32>
    %c0_10 = arith.constant 0 : index
    %c0_11 = arith.constant 0 : index
    %12 = vector.load %arg5[%c0_10, %c0_11] : memref<128x256xf32, #tpu.memory_space<vmem>>, vector<128x256xf32>
    %cst_12 = arith.constant dense<0.000000e+00> : vector<8x256xf32>
    %13 = tpu.matmul %7, %12, %cst_12 {dimension_numbers = #tpu.dot_dimension_numbers<[1], [0], [0], [1], [0, 0, 1, 1], [], []>} : vector<8x128xf32>, vector<128x256xf32>, vector<8x256xf32> -> vector<8x256xf32>
    %14 = arith.addf %11, %13 : vector<8x256xf32>
    %15 = vector.extract_strided_slice %14 {offsets = [0, 0], sizes = [8, 128], strides = [1, 1]} : vector<8x256xf32> to vector<8x128xf32>
    %16 = math.tanh %15 : vector<8x128xf32>
    %17 = vector.extract_strided_slice %14 {offsets = [0, 128], sizes = [8, 128], strides = [1, 1]} : vector<8x256xf32> to vector<8x128xf32>
    %18 = arith.negf %17 : vector<8x128xf32>
    %19 = math.exp %18 : vector<8x128xf32>
    %cst_13 = arith.constant 1.000000e+00 : f32
    %20 = vector.broadcast %cst_13 : f32 to vector<8x128xf32>
    %21 = arith.addf %20, %19 : vector<8x128xf32>
    %22 = arith.divf %20, %21 : vector<8x128xf32>
    %23 = arith.mulf %16, %22 : vector<8x128xf32>
    %24 = tpu.iota {dimensions = array<i32: 0>} : vector<8x128xi32>
    %25 = arith.index_cast %c0_i32 : i32 to index
    %26 = memref.load %arg1[%25] : memref<1xi32, #tpu.memory_space<smem>>
    %27 = vector.broadcast %26 : i32 to vector<8x128xi32>
    %28 = arith.cmpi slt, %24, %27 : vector<8x128xi32>
    %29 = arith.select %28, %23, %7 : vector<8x128xi1>, vector<8x128xf32>
    %c1_i32 = arith.constant 1 : i32
    %c0_14 = arith.constant 0 : index
    %c0_15 = arith.constant 0 : index
    %30 = vector.load %arg7[%c0_14, %c0_15] : memref<8x128xf32, #tpu.memory_space<vmem>>, vector<8x128xf32>
    tpu.vector_store %arg7[%c0_14, %c0_15], %29 {strides = array<i32>} : memref<8x128xf32, #tpu.memory_space<vmem>>, vector<8x128xf32>,
    return
  }
  func.func @transform_0(%arg0: i32, %arg1: memref<1xi32, #tpu.memory_space<smem>>) -> (i32, i32) {
    %c0_i32 = arith.constant 0 : i32
    %c0_i32_0 = arith.constant 0 : i32
    %c0_i32_1 = arith.constant 0 : i32
    return %c0_i32, %c0_i32_0 : i32, i32
  }
  func.func @transform_1(%arg0: i32, %arg1: memref<1xi32, #tpu.memory_space<smem>>) -> (i32, i32) {
    %c0_i32 = arith.constant 0 : i32
    %c0_i32_0 = arith.constant 0 : i32
    %c0_i32_1 = arith.constant 0 : i32
    return %c0_i32, %c0_i32_0 : i32, i32
  }
  func.func @transform_2(%arg0: i32, %arg1: memref<1xi32, #tpu.memory_space<smem>>) -> (i32, i32) {
    %c0_i32 = arith.constant 0 : i32
    %c0_i32_0 = arith.constant 0 : i32
    %c0_i32_1 = arith.constant 0 : i32
    return %c0_i32, %c0_i32_0 : i32, i32
  }
  func.func @transform_3(%arg0: i32, %arg1: memref<1xi32, #tpu.memory_space<smem>>) -> (i32, i32) {
    %c0_i32 = arith.constant 0 : i32
    %c0_i32_0 = arith.constant 0 : i32
    %c0_i32_1 = arith.constant 0 : i32
    return %c0_i32, %c0_i32_0 : i32, i32
  }
  func.func @transform_4(%arg0: i32, %arg1: memref<1xi32, #tpu.memory_space<smem>>) -> (i32, i32) {
    %c0_i32 = arith.constant 0 : i32
    %c0_i32_0 = arith.constant 0 : i32
    %c0_i32_1 = arith.constant 0 : i32
    return %c0_i32, %c0_i32_0 : i32, i32
  }
  func.func @transform_5(%arg0: i32, %arg1: memref<1xi32, #tpu.memory_space<smem>>) -> (i32, i32) {
    %c0_i32 = arith.constant 0 : i32
    %c0_i32_0 = arith.constant 0 : i32
    %c0_i32_1 = arith.constant 0 : i32
    return %c0_i32, %c0_i32_0 : i32, i32
  }
}

</mosaic_0001>

<llo_original>
// kernel: _tree_merge_call.1
$region0: #{_tree_merge_call.1}
  #allocation0 [shape = 'u32[]', space=smem, size = 0x4, offset = 0x4, fixed_abs, tag = 'smem constant byte address 0x4 - core index']
  #allocation1 [shape = 'u32[72,128]{1,0:T(1,128)}', space=vmem, size = 0x9000, scoped, tag = 'internal scratch']
  #allocation2 [shape = 'f32[8,256]{1,0:T(8,128)}', space=vmem, size = 0x2000, scoped, tag = 'scratch operand']
  #allocation3 [shape = 's32[1]{0}', space=sflag, size = 0x4, scoped, tag = 'scoped memory for _tree_merge_call.1']
  #allocation4 [shape = 's32[1]{0:T(128)S(6)}', space=smem, size = 0x200, scoped, tag = 'prefetched SMEM operand 0']
  %s0 = inlined_call_operand.<no memory space> [shape: s32[1], index: 0, kind: input, shape index: {}]
  %s1 = inlined_call_operand.hbm [shape: f32[8,256], index: 1, kind: input, shape index: {}]
  %s2 = inlined_call_operand.hbm [shape: f32[8,128], index: 2, kind: input, shape index: {}]
  %s3 = inlined_call_operand.hbm [shape: f32[256,256], index: 3, kind: input, shape index: {}]
  %s4 = inlined_call_operand.hbm [shape: f32[128,256], index: 4, kind: input, shape index: {}]
  %s5 = inlined_call_operand.vmem [shape: f32[1,256], index: 5, kind: input, shape index: {}]
  %s6 = inlined_call_operand.hbm [shape: f32[8,128], index: 6, kind: output, shape index: {}]
  %s7 = sld [smem:[#allocation0]]
  $region46: #{_tree_merge_call.1} parent=0
    _
  %s9 = ssub.s32 1, %s7
  %s10 = scalar_select 0, %s9, %s7
  %11 = sst [smem:[#allocation4]] %s0
  $region1: #{_tree_merge_call.1} parent=0
    #allocation5 [shape = 'u8[8192]{0}', space=vmem, size = 0x2000, scoped, tag = 'input window, operand 1, single buffered']
    #allocation6 [shape = 's32[1]{0}', space=sflag, size = 0x4, scoped, tag = 'scoped memory for _tree_merge_call.1']
    #allocation7 [shape = 's32[1]{0}', space=sflag, size = 0x4, scoped, tag = 'scoped memory for _tree_merge_call.1']
    #allocation8 [shape = 'u8[4096]{0}', space=vmem, size = 0x1000, scoped, tag = 'input window, operand 2, single buffered']
    #allocation9 [shape = 's32[1]{0}', space=sflag, size = 0x4, scoped, tag = 'scoped memory for _tree_merge_call.1']
    #allocation10 [shape = 'u8[262144]{0}', space=vmem, size = 0x40000, scoped, tag = 'input window, operand 3, single buffered']
    #allocation11 [shape = 'u8[131072]{0}', space=vmem, size = 0x20000, scoped, tag = 'input window, operand 4, single buffered']
    #allocation12 [shape = 's32[1]{0}', space=sflag, size = 0x4, scoped, tag = 'scoped memory for _tree_merge_call.1']
    #allocation13 [shape = 'u8[4096]{0}', space=vmem, size = 0x1000, scoped, tag = 'output window, operand 0, single buffered']
    %12 = vsyncpa [#allocation6], 0
    %13 = vsyncpa [#allocation9], 0
    %14 = vsyncpa [#allocation12], 0
    %15 = vsyncpa [#allocation7], 0
    // Predicated region
    $region2: #{_tree_merge_call.1} parent=1 // pred_check
      _
    $region3: #{_tree_merge_call.1} parent=1 // pred_check_branch
      %17 = sbr.rel (0) target = $region5
    $region4: #{_tree_merge_call.1} parent=1 // pred_region
      %19 = vsyncadd [#allocation6], 0
      %s21 = sshll.u32 %s1, 4
      %s22 = int_to_ptr.hbm [resolvable:$true] %s21
      %s23 = sshll.u32 [#allocation5], 4
      %s24 = int_to_ptr.vmem [resolvable:$true] %s23
      %26 = dma.hbm_to_vmem [thread:$0]  %s22, 256, %s24, [#allocation6]
    $region5: #{_tree_merge_call.1} parent=1 // pred_fallthru
      _
    // Predicated region
    $region6: #{_tree_merge_call.1} parent=1 // pred_check
      _
    $region7: #{_tree_merge_call.1} parent=1 // pred_check_branch
      %28 = sbr.rel (0) target = $region9
    $region8: #{_tree_merge_call.1} parent=1 // pred_region
      %30 = vsyncadd [#allocation9], 0
      %s32 = sshll.u32 %s2, 4
      %s33 = int_to_ptr.hbm [resolvable:$true] %s32
      %s34 = sshll.u32 [#allocation8], 4
      %s35 = int_to_ptr.vmem [resolvable:$true] %s34
      %37 = dma.hbm_to_vmem [thread:$0]  %s33, 128, %s35, [#allocation9]
    $region9: #{_tree_merge_call.1} parent=1 // pred_fallthru
      _
    // Predicated region
    $region10: #{_tree_merge_call.1} parent=1 // pred_check
      _
    $region11: #{_tree_merge_call.1} parent=1 // pred_check_branch
      %39 = sbr.rel (0) target = $region13
    $region12: #{_tree_merge_call.1} parent=1 // pred_region
      %41 = vsyncadd [#allocation9], 0
      %s42 = sshll.u32 %s3, 4
      %s43 = int_to_ptr.hbm [resolvable:$true] %s42
      %s44 = sshll.u32 [#allocation10], 4
      %s45 = int_to_ptr.vmem [resolvable:$true] %s44
      %50 = dma.hbm_to_vmem [thread:$0]  %s43, 8192, %s45, [#allocation9], 256, 256, 16
    $region13: #{_tree_merge_call.1} parent=1 // pred_fallthru
      _
    // Predicated region
    $region14: #{_tree_merge_call.1} parent=1 // pred_check
      _
    $region15: #{_tree_merge_call.1} parent=1 // pred_check_branch
      %52 = sbr.rel (0) target = $region17
    $region16: #{_tree_merge_call.1} parent=1 // pred_region
      %54 = vsyncadd [#allocation12], 0
      %s55 = sshll.u32 %s4, 4
      %s56 = int_to_ptr.hbm [resolvable:$true] %s55
      %s57 = sshll.u32 [#allocation11], 4
      %s58 = int_to_ptr.vmem [resolvable:$true] %s57
      %63 = dma.hbm_to_vmem [thread:$0]  %s56, 4096, %s58, [#allocation12], 256, 256, 16
    $region17: #{_tree_merge_call.1} parent=1 // pred_fallthru
      _
    // Predicated region
    $region18: #{_tree_merge_call.1} parent=1 // pred_check
      _
    $region19: #{_tree_merge_call.1} parent=1 // pred_check_branch
      %65 = sbr.rel (0) target = $region21
    $region20: #{_tree_merge_call.1} parent=1 // pred_region
      _
    $region21: #{_tree_merge_call.1} parent=1 // pred_fallthru
      _
    // Predicated region
    $region22: #{_tree_merge_call.1} parent=1 // pred_check
      _
    $region23: #{_tree_merge_call.1} parent=1 // pred_check_branch
      %67 = sbr.rel (0) target = $region25
    $region24: #{_tree_merge_call.1} parent=1 // pred_region
      %69 = dma.done [#allocation6], 256
    $region25: #{_tree_merge_call.1} parent=1 // pred_fallthru
      _
    // Predicated region
    $region26: #{_tree_merge_call.1} parent=1 // pred_check
      _
    $region27: #{_tree_merge_call.1} parent=1 // pred_check_branch
      %71 = sbr.rel (0) target = $region29
    $region28: #{_tree_merge_call.1} parent=1 // pred_region
      %73 = dma.done [#allocation9], 128
    $region29: #{_tree_merge_call.1} parent=1 // pred_fallthru
      _
    // Predicated region
    $region30: #{_tree_merge_call.1} parent=1 // pred_check
      _
    $region31: #{_tree_merge_call.1} parent=1 // pred_check_branch
      %75 = sbr.rel (0) target = $region33
    $region32: #{_tree_merge_call.1} parent=1 // pred_region
      %77 = dma.done [#allocation9], 8192
    $region33: #{_tree_merge_call.1} parent=1 // pred_fallthru
      _
    // Predicated region
    $region34: #{_tree_merge_call.1} parent=1 // pred_check
      _
    $region35: #{_tree_merge_call.1} parent=1 // pred_check_branch
      %79 = sbr.rel (0) target = $region37
    $region36: #{_tree_merge_call.1} parent=1 // pred_region
      %81 = dma.done [#allocation12], 4096
    $region37: #{_tree_merge_call.1} parent=1 // pred_fallthru
      _
    %v82 = vld [vmem:[#allocation5] sm:$0xff]
    %v83 = vld [vmem:[#allocation5 + $0x8] sm:$0xff]
    %v84 = vld [vmem:[#allocation10] sm:$0xff]
    %v85 = vld [vmem:[#allocation10 + $0x8] sm:$0xff]
    %v86 = vld [vmem:[#allocation10 + $0x10] sm:$0xff]
    %v87 = vld [vmem:[#allocation10 + $0x18] sm:$0xff]
    %v88 = vld [vmem:[#allocation10 + $0x20] sm:$0xff]
    %v89 = vld [vmem:[#allocation10 + $0x28] sm:$0xff]
    %v90 = vld [vmem:[#allocation10 + $0x30] sm:$0xff]
    %v91 = vld [vmem:[#allocation10 + $0x38] sm:$0xff]
    %v92 = vld [vmem:[#allocation10 + $0x40] sm:$0xff]
    %v93 = vld [vmem:[#allocation10 + $0x48] sm:$0xff]
    %v94 = vld [vmem:[#allocation10 + $0x50] sm:$0xff]
    %v95 = vld [vmem:[#allocation10 + $0x58] sm:$0xff]
    %v96 = vld [vmem:[#allocation10 + $0x60] sm:$0xff]
    %v97 = vld [vmem:[#allocation10 + $0x68] sm:$0xff]
    %v98 = vld [vmem:[#allocation10 + $0x70] sm:$0xff]
    %v99 = vld [vmem:[#allocation10 + $0x78] sm:$0xff]
    %v100 = vld [vmem:[#allocation10 + $0x80] sm:$0xff]
    %v101 = vld [vmem:[#allocation10 + $0x88] sm:$0xff]
    %v102 = vld [vmem:[#allocation10 + $0x90] sm:$0xff]
    %v103 = vld [vmem:[#allocation10 + $0x98] sm:$0xff]
    %v104 = vld [vmem:[#allocation10 + $0xa0] sm:$0xff]
    %v105 = vld [vmem:[#allocation10 + $0xa8] sm:$0xff]
    %v106 = vld [vmem:[#allocation10 + $0xb0] sm:$0xff]
    %v107 = vld [vmem:[#allocation10 + $0xb8] sm:$0xff]
    %v108 = vld [vmem:[#allocation10 + $0xc0] sm:$0xff]
    %v109 = vld [vmem:[#allocation10 + $0xc8] sm:$0xff]
    %v110 = vld [vmem:[#allocation10 + $0xd0] sm:$0xff]
    %v111 = vld [vmem:[#allocation10 + $0xd8] sm:$0xff]
    %v112 = vld [vmem:[#allocation10 + $0xe0] sm:$0xff]
    %v113 = vld [vmem:[#allocation10 + $0xe8] sm:$0xff]
    %v114 = vld [vmem:[#allocation10 + $0xf0] sm:$0xff]
    %v115 = vld [vmem:[#allocation10 + $0xf8] sm:$0xff]
    %v116 = vld [vmem:[#allocation10 + $0x100] sm:$0xff]
    %v117 = vld [vmem:[#allocation10 + $0x108] sm:$0xff]
    %v118 = vld [vmem:[#allocation10 + $0x110] sm:$0xff]
    %v119 = vld [vmem:[#allocation10 + $0x118] sm:$0xff]
    %v120 = vld [vmem:[#allocation10 + $0x120] sm:$0xff]
    %v121 = vld [vmem:[#allocation10 + $0x128] sm:$0xff]
    %v122 = vld [vmem:[#allocation10 + $0x130] sm:$0xff]
    %v123 = vld [vmem:[#allocation10 + $0x138] sm:$0xff]
    %v124 = vld [vmem:[#allocation10 + $0x140] sm:$0xff]
    %v125 = vld [vmem:[#allocation10 + $0x148] sm:$0xff]
    %v126 = vld [vmem:[#allocation10 + $0x150] sm:$0xff]
    %v127 = vld [vmem:[#allocation10 + $0x158] sm:$0xff]
    %v128 = vld [vmem:[#allocation10 + $0x160] sm:$0xff]
    %v129 = vld [vmem:[#allocation10 + $0x168] sm:$0xff]
    %v130 = vld [vmem:[#allocation10 + $0x170] sm:$0xff]
    %v131 = vld [vmem:[#allocation10 + $0x178] sm:$0xff]
    %v132 = vld [vmem:[#allocation10 + $0x180] sm:$0xff]
    %v133 = vld [vmem:[#allocation10 + $0x188] sm:$0xff]
    %v134 = vld [vmem:[#allocation10 + $0x190] sm:$0xff]
    %v135 = vld [vmem:[#allocation10 + $0x198] sm:$0xff]
    %v136 = vld [vmem:[#allocation10 + $0x1a0] sm:$0xff]
    %v137 = vld [vmem:[#allocation10 + $0x1a8] sm:$0xff]
    %v138 = vld [vmem:[#allocation10 + $0x1b0] sm:$0xff]
    %v139 = vld [vmem:[#allocation10 + $0x1b8] sm:$0xff]
    %v140 = vld [vmem:[#allocation10 + $0x1c0] sm:$0xff]
    %v141 = vld [vmem:[#allocation10 + $0x1c8] sm:$0xff]
    %v142 = vld [vmem:[#allocation10 + $0x1d0] sm:$0xff]
    %v143 = vld [vmem:[#allocation10 + $0x1d8] sm:$0xff]
    %v144 = vld [vmem:[#allocation10 + $0x1e0] sm:$0xff]
    %v145 = vld [vmem:[#allocation10 + $0x1e8] sm:$0xff]
    %v146 = vld [vmem:[#allocation10 + $0x1f0] sm:$0xff]
    %v147 = vld [vmem:[#allocation10 + $0x1f8] sm:$0xff]
    %v148 = vld [vmem:[%s5] sm:$0x3]
    %v150 = vperm.slane %v148, 0
    %v151 = vperm.slane %v148, 1
    %154 = vmatpush.msra.mxu0 %v114
    %155 = vmatpush.msra.mxu0 %v112
    %156 = vmatpush.msra.mxu0 %v110
    %157 = vmatpush.msra.mxu0 %v108
    %158 = vmatpush.msra.mxu0 %v106
    %159 = vmatpush.msra.mxu0 %v104
    %160 = vmatpush.msra.mxu0 %v102
    %161 = vmatpush.msra.mxu0 %v100
    %162 = vmatpush.msra.mxu0 %v98
    %163 = vmatpush.msra.mxu0 %v96
    %164 = vmatpush.msra.mxu0 %v94
    %165 = vmatpush.msra.mxu0 %v92
    %166 = vmatpush.msra.mxu0 %v90
    %167 = vmatpush.msra.mxu0 %v88
    %168 = vmatpush.msra.mxu0 %v86
    %169 = vmatpush.msra.mxu0 %v84
    %170 = vmatmul.f32.gmra.mxu0 %v82
    %v171 = vpop.f32.mrf.mxu0
    %v172 = vadd.f32 %v150, %v171
    %173 = vdwg.mxu0
    %174 = vmatpush.msra.mxu0 %v146
    %175 = vmatpush.msra.mxu0 %v144
    %176 = vmatpush.msra.mxu0 %v142
    %177 = vmatpush.msra.mxu0 %v140
    %178 = vmatpush.msra.mxu0 %v138
    %179 = vmatpush.msra.mxu0 %v136
    %180 = vmatpush.msra.mxu0 %v134
    %181 = vmatpush.msra.mxu0 %v132
    %182 = vmatpush.msra.mxu0 %v130
    %183 = vmatpush.msra.mxu0 %v128
    %184 = vmatpush.msra.mxu0 %v126
    %185 = vmatpush.msra.mxu0 %v124
    %186 = vmatpush.msra.mxu0 %v122
    %187 = vmatpush.msra.mxu0 %v120
    %188 = vmatpush.msra.mxu0 %v118
    %189 = vmatpush.msra.mxu0 %v116
    %190 = vmatmul.f32.gmra.mxu0 %v83
    %v191 = vpop.f32.mrf.mxu0
    %v192 = vadd.f32 %v172, %v191
    %193 = vdwg.mxu0
    %194 = vmatpush.msra.mxu0 %v115
    %195 = vmatpush.msra.mxu0 %v113
    %196 = vmatpush.msra.mxu0 %v111
    %197 = vmatpush.msra.mxu0 %v109
    %198 = vmatpush.msra.mxu0 %v107
    %199 = vmatpush.msra.mxu0 %v105
    %200 = vmatpush.msra.mxu0 %v103
    %201 = vmatpush.msra.mxu0 %v101
    %202 = vmatpush.msra.mxu0 %v99
    %203 = vmatpush.msra.mxu0 %v97
    %204 = vmatpush.msra.mxu0 %v95
    %205 = vmatpush.msra.mxu0 %v93
    %206 = vmatpush.msra.mxu0 %v91
    %207 = vmatpush.msra.mxu0 %v89
    %208 = vmatpush.msra.mxu0 %v87
    %209 = vmatpush.msra.mxu0 %v85
    %210 = vmatmul.f32.gmra.mxu0 %v82
    %v211 = vpop.f32.mrf.mxu0
    %v212 = vadd.f32 %v151, %v211
    %213 = vdwg.mxu0
    %214 = vmatpush.msra.mxu0 %v147
    %215 = vmatpush.msra.mxu0 %v145
    %216 = vmatpush.msra.mxu0 %v143
    %217 = vmatpush.msra.mxu0 %v141
    %218 = vmatpush.msra.mxu0 %v139
    %219 = vmatpush.msra.mxu0 %v137
    %220 = vmatpush.msra.mxu0 %v135
    %221 = vmatpush.msra.mxu0 %v133
    %222 = vmatpush.msra.mxu0 %v131
    %223 = vmatpush.msra.mxu0 %v129
    %224 = vmatpush.msra.mxu0 %v127
    %225 = vmatpush.msra.mxu0 %v125
    %226 = vmatpush.msra.mxu0 %v123
    %227 = vmatpush.msra.mxu0 %v121
    %228 = vmatpush.msra.mxu0 %v119
    %229 = vmatpush.msra.mxu0 %v117
    %230 = vmatmul.f32.gmra.mxu0 %v83
    %v231 = vpop.f32.mrf.mxu0
    %v232 = vadd.f32 %v212, %v231
    %233 = vdwg.mxu0
    %234 = vst [vmem:[#allocation2] sm:$0xff] %v192
    %235 = vst [vmem:[#allocation2 + $0x8] sm:$0xff] %v232
    %v236 = vld [vmem:[#allocation8] sm:$0xff]
    %s237 = smul.u32 0, 2
    %s238 = smul.addr %s237, 8
    %s239 = scalar_lea.vmem [#allocation2], %s238
    %v240 = vld [vmem:[%s239] sm:$0xff]
    %v241 = vld [vmem:[%s239 + $0x8] sm:$0xff]
    %v242 = vld [vmem:[#allocation11] sm:$0xff]
    %v243 = vld [vmem:[#allocation11 + $0x8] sm:$0xff]
    %v244 = vld [vmem:[#allocation11 + $0x10] sm:$0xff]
    %v245 = vld [vmem:[#allocation11 + $0x18] sm:$0xff]
    %v246 = vld [vmem:[#allocation11 + $0x20] sm:$0xff]
    %v247 = vld [vmem:[#allocation11 + $0x28] sm:$0xff]
    %v248 = vld [vmem:[#allocation11 + $0x30] sm:$0xff]
    %v249 = vld [vmem:[#allocation11 + $0x38] sm:$0xff]
    %v250 = vld [vmem:[#allocation11 + $0x40] sm:$0xff]
    %v251 = vld [vmem:[#allocation11 + $0x48] sm:$0xff]
    %v252 = vld [vmem:[#allocation11 + $0x50] sm:$0xff]
    %v253 = vld [vmem:[#allocation11 + $0x58] sm:$0xff]
    %v254 = vld [vmem:[#allocation11 + $0x60] sm:$0xff]
    %v255 = vld [vmem:[#allocation11 + $0x68] sm:$0xff]
    %v256 = vld [vmem:[#allocation11 + $0x70] sm:$0xff]
    %v257 = vld [vmem:[#allocation11 + $0x78] sm:$0xff]
    %v258 = vld [vmem:[#allocation11 + $0x80] sm:$0xff]
    %v259 = vld [vmem:[#allocation11 + $0x88] sm:$0xff]
    %v260 = vld [vmem:[#allocation11 + $0x90] sm:$0xff]
    %v261 = vld [vmem:[#allocation11 + $0x98] sm:$0xff]
    %v262 = vld [vmem:[#allocation11 + $0xa0] sm:$0xff]
    %v263 = vld [vmem:[#allocation11 + $0xa8] sm:$0xff]
    %v264 = vld [vmem:[#allocation11 + $0xb0] sm:$0xff]
    %v265 = vld [vmem:[#allocation11 + $0xb8] sm:$0xff]
    %v266 = vld [vmem:[#allocation11 + $0xc0] sm:$0xff]
    %v267 = vld [vmem:[#allocation11 + $0xc8] sm:$0xff]
    %v268 = vld [vmem:[#allocation11 + $0xd0] sm:$0xff]
    %v269 = vld [vmem:[#allocation11 + $0xd8] sm:$0xff]
    %v270 = vld [vmem:[#allocation11 + $0xe0] sm:$0xff]
    %v271 = vld [vmem:[#allocation11 + $0xe8] sm:$0xff]
    %v272 = vld [vmem:[#allocation11 + $0xf0] sm:$0xff]
    %v273 = vld [vmem:[#allocation11 + $0xf8] sm:$0xff]
    %274 = vmatpush.msra.mxu0 %v272
    %275 = vmatpush.msra.mxu0 %v270
    %276 = vmatpush.msra.mxu0 %v268
    %277 = vmatpush.msra.mxu0 %v266
    %278 = vmatpush.msra.mxu0 %v264
    %279 = vmatpush.msra.mxu0 %v262
    %280 = vmatpush.msra.mxu0 %v260
    %281 = vmatpush.msra.mxu0 %v258
    %282 = vmatpush.msra.mxu0 %v256
    %283 = vmatpush.msra.mxu0 %v254
    %284 = vmatpush.msra.mxu0 %v252
    %285 = vmatpush.msra.mxu0 %v250
    %286 = vmatpush.msra.mxu0 %v248
    %287 = vmatpush.msra.mxu0 %v246
    %288 = vmatpush.msra.mxu0 %v244
    %289 = vmatpush.msra.mxu0 %v242
    %290 = vmatmul.f32.gmra.mxu0 %v236
    %v291 = vpop.f32.mrf.mxu0
    %v292 = vadd.f32 0.0, %v291
    %293 = vdwg.mxu0
    %294 = vmatpush.msra.mxu0 %v273
    %295 = vmatpush.msra.mxu0 %v271
    %296 = vmatpush.msra.mxu0 %v269
    %297 = vmatpush.msra.mxu0 %v267
    %298 = vmatpush.msra.mxu0 %v265
    %299 = vmatpush.msra.mxu0 %v263
    %300 = vmatpush.msra.mxu0 %v261
    %301 = vmatpush.msra.mxu0 %v259
    %302 = vmatpush.msra.mxu0 %v257
    %303 = vmatpush.msra.mxu0 %v255
    %304 = vmatpush.msra.mxu0 %v253
    %305 = vmatpush.msra.mxu0 %v251
    %306 = vmatpush.msra.mxu0 %v249
    %307 = vmatpush.msra.mxu0 %v247
    %308 = vmatpush.msra.mxu0 %v245
    %309 = vmatpush.msra.mxu0 %v243
    %310 = vmatmul.f32.gmra.mxu0 %v236
    %v311 = vpop.f32.mrf.mxu0
    %v312 = vadd.f32 0.0, %v311
    %313 = vdwg.mxu0
    %v314 = vadd.f32 %v240, %v292
    %v315 = vadd.f32 %v241, %v312
    %v316 = vtanh.pop %v314
    %v317 = vxor.u32 %v315, 2147483648
    %v318 = vmul.f32 %v317, 1.442695
    %v319 = vpow.pop %v318
    %v320 = vadd.f32 %v319, 1.0
    %v321 = vrcp.pop %v320
    %v322 = vmul.f32 %v320, %v321
    %v323 = vsub.f32 1.0, %v322
    %v324 = vmul.f32 %v321, %v323
    %v325 = vadd.f32 %v321, %v324
    %vm326 = vweird.f32 %v320
    %vm327 = vweird.f32 %v321
    %vm328 = vmor %vm326, %vm327
    %v329 = vsel %vm328, %v321, %v325
    %v330 = vand.u32 2147483647, %v320
    %vm331 = vcmp.eq.f32.partialorder %v330, 8.507059e+37
    %v332 = vand.u32 %v320, 2147483648
    %v333 = vor.u32 1.1754944e-38, %v332
    %v334 = vsel %vm331, %v333, %v329
    %v335 = vmul.f32 1.0, %v334
    %v336 = vmul.f32 %v316, %v335
    %v337 = vlaneseq
    %v338 = vshrl.u32 %v337, 7
    %s339 = sld [smem:[#allocation4]]
    %v340 = vstv %s339
    %vm341 = vcmp.lt.s32.totalorder %v338, %v340
    %v342 = vsel %vm341, %v336, %v236
    %343 = vst [vmem:[#allocation13] sm:$0xff] %v342
    // Predicated region
    $region38: #{_tree_merge_call.1} parent=1 // pred_check
      _
    $region39: #{_tree_merge_call.1} parent=1 // pred_check_branch
      %345 = sbr.rel (0) target = $region41
    $region40: #{_tree_merge_call.1} parent=1 // pred_region
      %347 = vsyncadd [#allocation7], 0
      %s349 = sshll.u32 [#allocation13], 4
      %s350 = int_to_ptr.vmem [resolvable:$true] %s349
      %s351 = sshll.u32 %s6, 4
      %s352 = int_to_ptr.hbm [resolvable:$true] %s351
      %354 = dma.vmem_to_hbm [thread:$0]  %s350, 128, %s352, [#allocation7]
    $region41: #{_tree_merge_call.1} parent=1 // pred_fallthru
      _
    // Predicated region
    $region42: #{_tree_merge_call.1} parent=1 // pred_check
      _
    $region43: #{_tree_merge_call.1} parent=1 // pred_check_branch
      %356 = sbr.rel (0) target = $region45
    $region44: #{_tree_merge_call.1} parent=1 // pred_region
      %358 = dma.done [#allocation7], 128
    $region45: #{_tree_merge_call.1} parent=1 // pred_fallthru
      _
    %359 = vsyncpa [#allocation6], 1
    %360 = vsyncpa [#allocation9], 1
    %361 = vsyncpa [#allocation12], 1
    %362 = vsyncpa [#allocation7], 1

</llo_original>
